<compile_context>
chip_gen: v6e
topology: v6e:2x2x1
jax: 0.10.0
libtpu: 0.0.40
codegen_flags: <defaults>
</compile_context>

<pallas_src>
import jax
import jax.numpy as jnp
from jax import lax
from jax.experimental import pallas as pl
from jax.experimental.pallas import tpu as pltpu


def _round_up(n, m):
    return ((n + m - 1) // m) * m


def _vmem_limit_bytes():
    """Scoped-VMEM limit: half of physical VMEM, capped at 64 MiB.

    v5e/v6e have 128 MiB physical (-> 64 MiB limit), v7x has 64 MiB
    (-> 32 MiB limit).  Falls back to the v7x-safe 32 MiB if the query fails.
    """
    try:
        phys = int(pltpu.get_tpu_info().vmem_capacity_bytes)
    except Exception:
        phys = 64 << 20
    return min(phys // 2, 64 << 20)


def _tile_cap_from_vmem(input_dim, fc1, fc2, vmem_limit):
    """Largest batch tile (multiple of 128) whose working set fits the VMEM budget.

    Conservative accounting: default double-buffering for every input
    (including the VMEM-resident weights), f32 h1/h2 intermediates plus their
    bf16 copies, and the double-buffered output row.
    """
    weight_bytes = 2 * (4 * (input_dim * fc1 + fc1 + fc2 + 1) + 2 * (fc1 * fc2 + fc2))
    per_row = 4 * (2 * input_dim + fc1 + fc2 + 2) + 2 * (fc1 + fc2)
    budget = int(vmem_limit * 0.75) - weight_bytes
    cap = max(budget, 0) // max(per_row, 1)
    cap = (cap // 128) * 128
    return int(min(max(cap, 128), 2048))


def _choose_tile_b(batch, cap):
    """Batch-tile heuristic.

    * batch <= 128: a single tile of round_up(batch, 8).  The value-head output
      is only tile_b*4 bytes, so the masked store it implies is negligible next
      to the 16x x-DMA waste that padding tiny batches to 128 would cost.
    * batch  > 128: biggest multiple-of-128 tile within the VMEM cap that keeps
      padding waste small, preferring an even number of tiles (>= 2) so both
      v7x TensorCores get balanced work on the 'parallel' batch axis.
    """
    if batch <= 128:
        return _round_up(max(batch, 1), 8)
    best, best_even = 128, None
    max_waste = max(batch // 8, 127)
    t = 128
    while t <= cap:
        nt = -(-batch // t)          # ceil(batch / t)
        if nt < 2:
            break
        if nt * t - batch <= max_waste:
            best = t
            if nt % 2 == 0:
                best_even = t
        t += 128
    if best_even is not None and best_even * 2 >= best:
        return best_even
    return best


def critic_kernel(x_ref, w1_ref, b1_ref, w2_ref, b2_ref, w3_ref, b3_ref, o_ref):
    """One batch tile of the critic MLP.

    x_ref  : (TILE_B, in)    f32   (tiled over batch; cast-free HBM stream)
    w1_ref : (in, fc1)       f32   (resident; layer 1 kept in f32)
    b1_ref : (1, fc1)        f32
    w2_ref : (fc1, fc2)      bf16  (resident)
    b2_ref : (1, fc2)        f32
    w3_ref : (1, fc2)        bf16  (resident value-head weight, stored as a row)
    b3_ref : (1, 1)          f32
    o_ref  : (1, 1, TILE_B)  f32   (lane-dense value-head output slab)
    """
    x = x_ref[...]

    # layer 1 + ReLU — full f32 (observations may be unnormalized / large).
    h1 = jnp.dot(x, w1_ref[...], preferred_element_type=jnp.float32) + b1_ref[...]
    h1 = jnp.maximum(h1, 0.0)

    # layer 2 + ReLU — bf16 MXU operands, f32 accumulate, f32 elementwise.
    h2 = jnp.dot(h1.astype(jnp.bfloat16), w2_ref[...],
                 preferred_element_type=jnp.float32) + b2_ref[...]
    h2 = jnp.maximum(h2, 0.0)

    # layer 3 (value head, out dim 1): contract the fc2 axis of the weight row
    # against the fc2 axis of h2 so the result is a lane-dense (1, TILE_B) row
    # rather than a 1-of-128-lane (TILE_B, 1) column.
    v = lax.dot_general(
        w3_ref[...], h2.astype(jnp.bfloat16),
        dimension_numbers=(((1,), (1,)), ((), ())),
        preferred_element_type=jnp.float32,
    )  # (1, TILE_B)

    o_ref[0] = v + b3_ref[...]   # b3 (1,1) broadcasts across the TILE_B lanes


def critic_forward(x, prepared_params, *, tile_b=None):
    """x: (batch, input_dim) float32 observations (fed to the kernel as-is).

    prepared_params: output of prepare_critic_params() — all weight transforms
    and casts are done ONCE there, never per forward call.
    Returns (batch, 1) float32.
    """
    w1, b1, w2, b2, w3_row, b3 = prepared_params
    batch, input_dim = x.shape
    fc1 = w1.shape[1]
    fc2 = w2.shape[1]

    vmem_limit = _vmem_limit_bytes()
    if tile_b is None:
        tile_b = _choose_tile_b(batch, _tile_cap_from_vmem(input_dim, fc1, fc2, vmem_limit))
    assert tile_b % 8 == 0, "tile_b must be a multiple of 8 (sublane alignment)"

    padded = _round_up(batch, tile_b)
    num_tiles = padded // tile_b
    x_p = x if padded == batch else jnp.pad(x, ((0, padded - batch), (0, 0)))

    in_specs = [
        # x: tiled over batch (double-buffered by the pipeline)
        pl.BlockSpec((tile_b, input_dim), lambda i: (i, 0)),
        # weights / biases: constant index_map -> VMEM-resident across steps
        pl.BlockSpec((input_dim, fc1), lambda i: (0, 0)),
        pl.BlockSpec((1, fc1), lambda i: (0, 0)),
        pl.BlockSpec((fc1, fc2), lambda i: (0, 0)),
        pl.BlockSpec((1, fc2), lambda i: (0, 0)),
        pl.BlockSpec((1, fc2), lambda i: (0, 0)),
        pl.BlockSpec((1, 1), lambda i: (0, 0)),
    ]
    out_specs = pl.BlockSpec((1, 1, tile_b), lambda i: (i, 0, 0))
    out_shape = jax.ShapeDtypeStruct((num_tiles, 1, tile_b), jnp.float32)

    flops = 2 * padded * (input_dim * fc1 + fc1 * fc2 + fc2)
    bytes_accessed = (
        x_p.size * x_p.dtype.itemsize
        + sum(int(a.size) * a.dtype.itemsize for a in (w1, b1, w2, b2, w3_row, b3))
        + padded * 4
    )

    out = pl.pallas_call(
        critic_kernel,
        out_shape=out_shape,
        grid=(num_tiles,),
        in_specs=in_specs,
        out_specs=out_specs,
        compiler_params=pltpu.CompilerParams(
            dimension_semantics=("parallel",),
            vmem_limit_bytes=vmem_limit),
        cost_estimate=pl.CostEstimate(
            flops=int(flops), transcendentals=0, bytes_accessed=int(bytes_accessed)),
    )(x_p, w1, b1, w2, b2, w3_row, b3)

    # (num_tiles, 1, tile_b) -> (padded, 1) -> (batch, 1)
    return out.reshape(padded, 1)[:batch]


def init_critic_params(key, input_dim, fc1, fc2):
    """PyTorch nn.Linear default init: U(-1/sqrt(fan_in), 1/sqrt(fan_in)).

    Weights are stored as (in, out) (= PyTorch weight.T), biases as (1, out).
    """
    ks = jax.random.split(key, 6)

    def linear(kw, kb, fan_in, fan_out):
        bound = 1.0 / jnp.sqrt(fan_in)
        w = jax.random.uniform(kw, (fan_in, fan_out), jnp.float32, -bound, bound)
        b = jax.random.uniform(kb, (1, fan_out), jnp.float32, -bound, bound)
        return w, b

    w1, b1 = linear(ks[0], ks[1], input_dim, fc1)
    w2, b2 = linear(ks[2], ks[3], fc1, fc2)
    w3, b3 = linear(ks[4], ks[5], fc2, 1)
    return (w1, b1, w2, b2, w3, b3)


def prepare_critic_params(params):
    """One-time weight transforms (hoisted out of the per-call path):
    layer-1 stays f32; layer-2/3 weights cast to bf16; value-head weight stored
    as a (1, fc2) row; b3 as (1, 1)."""
    w1, b1, w2, b2, w3, b3 = params
    return (
        w1.astype(jnp.float32),
        b1.reshape(1, -1).astype(jnp.float32),
        w2.astype(jnp.bfloat16),
        b2.reshape(1, -1).astype(jnp.float32),
        jnp.transpose(w3).astype(jnp.bfloat16),   # (1, fc2)
        b3.reshape(1, 1).astype(jnp.float32),
    )


def critic_reference(x, params, match_kernel_precision=True):
    """Plain-JAX reference on the raw (un-prepared) params."""
    w1, b1, w2, b2, w3, b3 = params
    h1 = jnp.maximum(jnp.dot(x, w1, preferred_element_type=jnp.float32) + b1, 0.0)
    if match_kernel_precision:
        c = lambda a: a.astype(jnp.bfloat16)
        h2 = jnp.maximum(jnp.dot(c(h1), c(w2), preferred_element_type=jnp.float32) + b2, 0.0)
        return jnp.dot(c(h2), c(w3), preferred_element_type=jnp.float32) + b3
    h2 = jnp.maximum(h1 @ w2 + b2, 0.0)
    return h2 @ w3 + b3


if __name__ == "__main__":
    key = jax.random.PRNGKey(0)
    k_obs, k_params, k_obs2 = jax.random.split(key, 3)

    batch, input_dim, fc1, fc2 = 8, 32, 64, 32
    params = init_critic_params(k_params, input_dim, fc1, fc2)
    prepared = prepare_critic_params(params)   # one-time; reused across calls

    # small-batch path: single tile of round_up(8, 8) = 8 rows (no 128-padding)
    observation = jax.random.normal(k_obs, (batch, input_dim), jnp.float32)
    out = jax.block_until_ready(critic_forward(observation, prepared))
    assert out.shape == (batch, 1)

    ref_m = critic_reference(observation, params, match_kernel_precision=True)
    assert jnp.allclose(out, ref_m, atol=2e-3, rtol=2e-3), "mismatch vs precision-matched reference"
    ref_f = critic_reference(observation, params, match_kernel_precision=False)
    assert jnp.allclose(out, ref_f, atol=5e-2, rtol=5e-2), "mismatch vs f32 reference"

    # multi-tile + ragged tail: batch=300 -> auto tile_b=128, 3 batch tiles
    observation2 = jax.random.normal(k_obs2, (300, input_dim), jnp.float32)
    out2 = jax.block_until_ready(critic_forward(observation2, prepared))
    assert out2.shape == (300, 1)
    ref2 = critic_reference(observation2, params, match_kernel_precision=True)
    assert jnp.allclose(out2, ref2, atol=2e-3, rtol=2e-3), "mismatch on multi-tile path"

    print("KERNEL_OK")
</pallas_src>

<mosaic_0001>
module attributes {stable_mosaic.version = 11 : i64} {
  func.func @critic_kernel(%arg0: i32, %arg1: memref<8x32xf32, #tpu.memory_space<vmem>>, %arg2: memref<32x64xf32, #tpu.memory_space<vmem>>, %arg3: memref<1x64xf32, #tpu.memory_space<vmem>>, %arg4: memref<64x32xbf16, #tpu.memory_space<vmem>>, %arg5: memref<1x32xf32, #tpu.memory_space<vmem>>, %arg6: memref<1x32xbf16, #tpu.memory_space<vmem>>, %arg7: memref<1x1xf32, #tpu.memory_space<vmem>>, %arg8: memref<1x1x8xf32, #tpu.memory_space<vmem>>) attributes {dimension_semantics = [#tpu.dimension_semantics<parallel>], iteration_bounds = array<i64: 1>, scalar_prefetch = 0 : i64, scratch_operands = 0 : i64, tpu.core_type = #tpu.core_type<tc>, window_params = [{transform_indices = @transform_0, window_bounds = array<i64: 8, 32>}, {pipeline_mode = #tpu.pipeline_mode<synchronous>, transform_indices = @transform_1, window_bounds = array<i64: 32, 64>}, {pipeline_mode = #tpu.pipeline_mode<synchronous>, transform_indices = @transform_2, window_bounds = array<i64: 1, 64>}, {pipeline_mode = #tpu.pipeline_mode<synchronous>, transform_indices = @transform_3, window_bounds = array<i64: 64, 32>}, {pipeline_mode = #tpu.pipeline_mode<synchronous>, transform_indices = @transform_4, window_bounds = array<i64: 1, 32>}, {pipeline_mode = #tpu.pipeline_mode<synchronous>, transform_indices = @transform_5, window_bounds = array<i64: 1, 32>}, {pipeline_mode = #tpu.pipeline_mode<synchronous>, transform_indices = @transform_6, window_bounds = array<i64: 1, 1>}, {transform_indices = @transform_7, window_bounds = array<i64: 1, 1, 8>}]} {
    %c0 = arith.constant 0 : index
    %c0_0 = arith.constant 0 : index
    %0 = vector.load %arg1[%c0, %c0_0] : memref<8x32xf32, #tpu.memory_space<vmem>>, vector<8x32xf32>
    %c0_1 = arith.constant 0 : index
    %c0_2 = arith.constant 0 : index
    %1 = vector.load %arg2[%c0_1, %c0_2] : memref<32x64xf32, #tpu.memory_space<vmem>>, vector<32x64xf32>
    %cst = arith.constant dense<0.000000e+00> : vector<8x64xf32>
    %2 = tpu.matmul %0, %1, %cst {dimension_numbers = #tpu.dot_dimension_numbers<[1], [0], [0], [1], [0, 0, 1, 1], [], []>} : vector<8x32xf32>, vector<32x64xf32>, vector<8x64xf32> -> vector<8x64xf32>
    %c0_3 = arith.constant 0 : index
    %c0_4 = arith.constant 0 : index
    %3 = vector.load %arg3[%c0_3, %c0_4] : memref<1x64xf32, #tpu.memory_space<vmem>>, vector<1x64xf32>
    %4 = vector.broadcast %3 : vector<1x64xf32> to vector<8x64xf32>
    %5 = arith.addf %2, %4 : vector<8x64xf32>
    %cst_5 = arith.constant 0.000000e+00 : f32
    %6 = vector.broadcast %cst_5 : f32 to vector<8x64xf32>
    %7 = arith.maximumf %5, %6 : vector<8x64xf32>
    %8 = arith.truncf %7 : vector<8x64xf32> to vector<8x64xbf16>
    %c0_6 = arith.constant 0 : index
    %c0_7 = arith.constant 0 : index
    %9 = vector.load %arg4[%c0_6, %c0_7] : memref<64x32xbf16, #tpu.memory_space<vmem>>, vector<64x32xbf16>
    %cst_8 = arith.constant dense<0.000000e+00> : vector<8x32xf32>
    %10 = tpu.matmul %8, %9, %cst_8 {dimension_numbers = #tpu.dot_dimension_numbers<[1], [0], [0], [1], [0, 0, 1, 1], [], []>} : vector<8x64xbf16>, vector<64x32xbf16>, vector<8x32xf32> -> vector<8x32xf32>
    %c0_9 = arith.constant 0 : index
    %c0_10 = arith.constant 0 : index
    %11 = vector.load %arg5[%c0_9, %c0_10] : memref<1x32xf32, #tpu.memory_space<vmem>>, vector<1x32xf32>
    %12 = vector.broadcast %11 : vector<1x32xf32> to vector<8x32xf32>
    %13 = arith.addf %10, %12 : vector<8x32xf32>
    %cst_11 = arith.constant 0.000000e+00 : f32
    %14 = vector.broadcast %cst_11 : f32 to vector<8x32xf32>
    %15 = arith.maximumf %13, %14 : vector<8x32xf32>
    %c0_12 = arith.constant 0 : index
    %c0_13 = arith.constant 0 : index
    %16 = vector.load %arg6[%c0_12, %c0_13] : memref<1x32xbf16, #tpu.memory_space<vmem>>, vector<1x32xbf16>
    %17 = arith.truncf %15 : vector<8x32xf32> to vector<8x32xbf16>
    %cst_14 = arith.constant dense<0.000000e+00> : vector<1x8xf32>
    %18 = tpu.matmul %16, %17, %cst_14 {dimension_numbers = #tpu.dot_dimension_numbers<[1], [1], [0], [0], [0, 0, 1, 0], [], []>} : vector<1x32xbf16>, vector<8x32xbf16>, vector<1x8xf32> -> vector<1x8xf32>
    %c0_15 = arith.constant 0 : index
    %c0_16 = arith.constant 0 : index
    %19 = vector.load %arg7[%c0_15, %c0_16] : memref<1x1xf32, #tpu.memory_space<vmem>>, vector<1x1xf32>
    %20 = vector.broadcast %19 : vector<1x1xf32> to vector<1x8xf32>
    %21 = arith.addf %18, %20 : vector<1x8xf32>
    %c0_17 = arith.constant 0 : index
    %c0_18 = arith.constant 0 : index
    %c0_19 = arith.constant 0 : index
    %22 = vector.load %arg8[%c0_17, %c0_18, %c0_19] : memref<1x1x8xf32, #tpu.memory_space<vmem>>, vector<1x1x8xf32>
    %23 = vector.shape_cast %22 : vector<1x1x8xf32> to vector<1x8xf32>
    %24 = vector.shape_cast %21 : vector<1x8xf32> to vector<1x1x8xf32>
    tpu.vector_store %arg8[%c0_17, %c0_18, %c0_19], %24 {strides = array<i32>} : memref<1x1x8xf32, #tpu.memory_space<vmem>>, vector<1x1x8xf32>,
    return
  }
  func.func @transform_0(%arg0: i32) -> (i32, i32) {
    %c0_i32 = arith.constant 0 : i32
    %c0_i32_0 = arith.constant 0 : i32
    return %arg0, %c0_i32 : i32, i32
  }
  func.func @transform_1(%arg0: i32) -> (i32, i32) {
    %c0_i32 = arith.constant 0 : i32
    %c0_i32_0 = arith.constant 0 : i32
    %c0_i32_1 = arith.constant 0 : i32
    return %c0_i32, %c0_i32_0 : i32, i32
  }
  func.func @transform_2(%arg0: i32) -> (i32, i32) {
    %c0_i32 = arith.constant 0 : i32
    %c0_i32_0 = arith.constant 0 : i32
    %c0_i32_1 = arith.constant 0 : i32
    return %c0_i32, %c0_i32_0 : i32, i32
  }
  func.func @transform_3(%arg0: i32) -> (i32, i32) {
    %c0_i32 = arith.constant 0 : i32
    %c0_i32_0 = arith.constant 0 : i32
    %c0_i32_1 = arith.constant 0 : i32
    return %c0_i32, %c0_i32_0 : i32, i32
  }
  func.func @transform_4(%arg0: i32) -> (i32, i32) {
    %c0_i32 = arith.constant 0 : i32
    %c0_i32_0 = arith.constant 0 : i32
    %c0_i32_1 = arith.constant 0 : i32
    return %c0_i32, %c0_i32_0 : i32, i32
  }
  func.func @transform_5(%arg0: i32) -> (i32, i32) {
    %c0_i32 = arith.constant 0 : i32
    %c0_i32_0 = arith.constant 0 : i32
    %c0_i32_1 = arith.constant 0 : i32
    return %c0_i32, %c0_i32_0 : i32, i32
  }
  func.func @transform_6(%arg0: i32) -> (i32, i32) {
    %c0_i32 = arith.constant 0 : i32
    %c0_i32_0 = arith.constant 0 : i32
    %c0_i32_1 = arith.constant 0 : i32
    return %c0_i32, %c0_i32_0 : i32, i32
  }
  func.func @transform_7(%arg0: i32) -> (i32, i32, i32) {
    %c0_i32 = arith.constant 0 : i32
    %c0_i32_0 = arith.constant 0 : i32
    %c0_i32_1 = arith.constant 0 : i32
    return %arg0, %c0_i32, %c0_i32_0 : i32, i32, i32
  }
}

</mosaic_0001>

<llo_original>
// kernel: tpu_custom_call.1
$region0: #{tpu_custom_call.1}
  #allocation0 [shape = 'u32[]', space=smem, size = 0x4, offset = 0x4, fixed_abs, tag = 'smem constant byte address 0x4 - core index']
  #allocation1 [shape = 'u32[144,128]{1,0:T(1,128)}', space=vmem, size = 0x12000, scoped, tag = 'internal scratch']
  #allocation2 [shape = 'f32[1,1]{1,0:T(1,128)S(1)}', space=vmem, size = 0x200, scoped, tag = 'scoped memory for tpu_custom_call.1']
  %s0 = inlined_call_operand.vmem [shape: f32[8,32], index: 0, kind: input, shape index: {}]
  %s1 = inlined_call_operand.vmem [shape: f32[32,64], index: 1, kind: input, shape index: {}]
  %s2 = inlined_call_operand.vmem [shape: f32[1,64], index: 2, kind: input, shape index: {}]
  %s3 = inlined_call_operand.vmem [shape: bf16[64,32], index: 3, kind: input, shape index: {}]
  %s4 = inlined_call_operand.vmem [shape: f32[1,32], index: 4, kind: input, shape index: {}]
  %s5 = inlined_call_operand.vmem [shape: bf16[1,32], index: 5, kind: input, shape index: {}]
  %s6 = inlined_call_operand.<no memory space> [shape: f32[1,1], index: 6, kind: input, shape index: {}]
  %s7 = inlined_call_operand.hbm [shape: f32[1,1,8], index: 7, kind: output, shape index: {}]
  %s8 = sld [smem:[#allocation0]]
  $region38: #{tpu_custom_call.1} parent=0
    _
  %s10 = ssub.s32 1, %s8
  %s11 = scalar_select 0, %s10, %s8
  %v12 = vstv %s6
  %13 = vst [vmem:[#allocation2] sm:$0x1] %v12
  $region1: #{tpu_custom_call.1} parent=0
    #allocation3 [shape = 'u8[512]{0}', space=vmem, size = 0x400, scoped, tag = 'output window, operand 0, single buffered']
    #allocation4 [shape = 's32[1]{0}', space=sflag, size = 0x4, scoped, tag = 'scoped memory for tpu_custom_call.1']
    %14 = vsyncpa [#allocation4], 0
    // Predicated region
    $region2: #{tpu_custom_call.1} parent=1 // pred_check
      _
    $region3: #{tpu_custom_call.1} parent=1 // pred_check_branch
      %16 = sbr.rel (0) target = $region5
    $region4: #{tpu_custom_call.1} parent=1 // pred_region
      _
    $region5: #{tpu_custom_call.1} parent=1 // pred_fallthru
      _
    // Predicated region
    $region6: #{tpu_custom_call.1} parent=1 // pred_check
      _
    $region7: #{tpu_custom_call.1} parent=1 // pred_check_branch
      %18 = sbr.rel (0) target = $region9
    $region8: #{tpu_custom_call.1} parent=1 // pred_region
      _
    $region9: #{tpu_custom_call.1} parent=1 // pred_fallthru
      _
    // Predicated region
    $region10: #{tpu_custom_call.1} parent=1 // pred_check
      _
    $region11: #{tpu_custom_call.1} parent=1 // pred_check_branch
      %20 = sbr.rel (0) target = $region13
    $region12: #{tpu_custom_call.1} parent=1 // pred_region
      _
    $region13: #{tpu_custom_call.1} parent=1 // pred_fallthru
      _
    // Predicated region
    $region14: #{tpu_custom_call.1} parent=1 // pred_check
      _
    $region15: #{tpu_custom_call.1} parent=1 // pred_check_branch
      %22 = sbr.rel (0) target = $region17
    $region16: #{tpu_custom_call.1} parent=1 // pred_region
      _
    $region17: #{tpu_custom_call.1} parent=1 // pred_fallthru
      _
    // Predicated region
    $region18: #{tpu_custom_call.1} parent=1 // pred_check
      _
    $region19: #{tpu_custom_call.1} parent=1 // pred_check_branch
      %24 = sbr.rel (0) target = $region21
    $region20: #{tpu_custom_call.1} parent=1 // pred_region
      _
    $region21: #{tpu_custom_call.1} parent=1 // pred_fallthru
      _
    // Predicated region
    $region22: #{tpu_custom_call.1} parent=1 // pred_check
      _
    $region23: #{tpu_custom_call.1} parent=1 // pred_check_branch
      %26 = sbr.rel (0) target = $region25
    $region24: #{tpu_custom_call.1} parent=1 // pred_region
      _
    $region25: #{tpu_custom_call.1} parent=1 // pred_fallthru
      _
    // Predicated region
    $region26: #{tpu_custom_call.1} parent=1 // pred_check
      _
    $region27: #{tpu_custom_call.1} parent=1 // pred_check_branch
      %28 = sbr.rel (0) target = $region29
    $region28: #{tpu_custom_call.1} parent=1 // pred_region
      _
    $region29: #{tpu_custom_call.1} parent=1 // pred_fallthru
      _
    %v30 = vld [vmem:[%s0] sm:$0xff]
    %v31 = vld [vmem:[%s1] sm:$0xff]
    %v32 = vld [vmem:[%s1 + $0x8] sm:$0xff]
    %v33 = vld [vmem:[%s1 + $0x10] sm:$0xff]
    %v34 = vld [vmem:[%s1 + $0x18] sm:$0xff]
    %v35 = vld [vmem:[%s2] sm:$0x1]
    %v37 = vlaneseq
    %v38 = vshrl.u32 %v37, 7
    %v39 = vsub.s32 0, %v38
    %v40 = vrot.slane %v35, %v39
    %vm42 = vcmask 261120
    %v44 = vsel %vm42, %v30, 0
    %46 = vmatprep.subr.mxu0 0.0
    %47 = vmatpush1.msra.mxu0 0.0
    %48 = vmatprep.subr.mxu0 0.0
    %49 = vmatpush1.msra.mxu0 0.0
    %50 = vmatprep.subr.mxu0 0.0
    %51 = vmatpush1.msra.mxu0 0.0
    %52 = vmatprep.subr.mxu0 0.0
    %53 = vmatpush1.msra.mxu0 0.0
    %54 = vmatprep.subr.mxu0 0.0
    %55 = vmatpush1.msra.mxu0 0.0
    %56 = vmatprep.subr.mxu0 0.0
    %57 = vmatpush1.msra.mxu0 0.0
    %58 = vmatprep.subr.mxu0 0.0
    %59 = vmatpush1.msra.mxu0 0.0
    %60 = vmatprep.subr.mxu0 0.0
    %61 = vmatpush1.msra.mxu0 0.0
    %62 = vmatprep.subr.mxu0 0.0
    %63 = vmatpush1.msra.mxu0 0.0
    %64 = vmatprep.subr.mxu0 0.0
    %65 = vmatpush1.msra.mxu0 0.0
    %66 = vmatprep.subr.mxu0 0.0
    %67 = vmatpush1.msra.mxu0 0.0
    %68 = vmatprep.subr.mxu0 0.0
    %69 = vmatpush1.msra.mxu0 0.0
    %70 = vmatprep.subr.mxu0 0.0
    %71 = vmatpush1.msra.mxu0 %v34
    %72 = vmatprep.subr.mxu0 0.0
    %73 = vmatpush1.msra.mxu0 %v33
    %74 = vmatprep.subr.mxu0 0.0
    %75 = vmatpush1.msra.mxu0 %v32
    %76 = vmatprep.subr.mxu0 0.0
    %77 = vmatpush1.msra.mxu0 %v31
    %78 = vmatprep.subr.mxu0 0.0
    %79 = vmatpush2.msra.mxu0 0.0
    %80 = vmatprep.subr.mxu0 0.0
    %81 = vmatpush2.msra.mxu0 0.0
    %82 = vmatprep.subr.mxu0 0.0
    %83 = vmatpush2.msra.mxu0 0.0
    %84 = vmatprep.subr.mxu0 0.0
    %85 = vmatpush2.msra.mxu0 0.0
    %86 = vmatprep.subr.mxu0 0.0
    %87 = vmatpush2.msra.mxu0 0.0
    %88 = vmatprep.subr.mxu0 0.0
    %89 = vmatpush2.msra.mxu0 0.0
    %90 = vmatprep.subr.mxu0 0.0
    %91 = vmatpush2.msra.mxu0 0.0
    %92 = vmatprep.subr.mxu0 0.0
    %93 = vmatpush2.msra.mxu0 0.0
    %94 = vmatprep.subr.mxu0 0.0
    %95 = vmatpush2.msra.mxu0 0.0
    %96 = vmatprep.subr.mxu0 0.0
    %97 = vmatpush2.msra.mxu0 0.0
    %98 = vmatprep.subr.mxu0 0.0
    %99 = vmatpush2.msra.mxu0 0.0
    %100 = vmatprep.subr.mxu0 0.0
    %101 = vmatpush2.msra.mxu0 0.0
    %102 = vmatprep.subr.mxu0 0.0
    %103 = vmatpush2.msra.mxu0 0.0
    %104 = vmatprep.subr.mxu0 0.0
    %105 = vmatpush2.msra.mxu0 0.0
    %106 = vmatprep.subr.mxu0 0.0
    %107 = vmatpush2.msra.mxu0 0.0
    %108 = vmatprep.subr.mxu0 0.0
    %109 = vmatpush2.msra.mxu0 0.0
    %110 = vmatprep.mubr.f32.mxu0 0.0
    %111 = vmatmul.mubr.f32.gmra.mxu0 %v44
    %v112 = vpop.f32.mrf.mxu0
    %v113 = vadd.f32 %v40, %v112
    %v114 = vpop.f32.mrf.mxu0
    %115 = vdwg.mxu0
    %v116 = vmax.f32 %v113, 0.0
    %v117 = vpack.c.bf16 %v116, %v116
    %v118 = vld [vmem:[%s3] sm:$0xf]
    %v119 = vld [vmem:[%s3 + $0x4] sm:$0xf]
    %v120 = vld [vmem:[%s3 + $0x8] sm:$0xf]
    %v121 = vld [vmem:[%s3 + $0xc] sm:$0xf]
    %v122 = vld [vmem:[%s3 + $0x10] sm:$0xf]
    %v123 = vld [vmem:[%s3 + $0x14] sm:$0xf]
    %v124 = vld [vmem:[%s3 + $0x18] sm:$0xf]
    %v125 = vld [vmem:[%s3 + $0x1c] sm:$0xf]
    %v126 = vld [vmem:[%s4] sm:$0x1]
    %v128 = vlaneseq
    %v129 = vshrl.u32 %v128, 7
    %v130 = vsub.s32 0, %v129
    %v131 = vrot.slane %v126, %v130
    %v141 = vunpack.c.l.b16 %v118
    %v142 = vunpack.c.l.b16 %v119
    %v143 = vunpack.c.l.b16 %v120
    %v144 = vunpack.c.l.b16 %v121
    %v145 = vunpack.c.l.b16 %v122
    %v146 = vunpack.c.l.b16 %v123
    %v147 = vunpack.c.l.b16 %v124
    %v148 = vunpack.c.l.b16 %v125
    %v149 = vpack.c.b16 %v142, %v141
    %v150 = vpack.c.b16 %v144, %v143
    %v151 = vpack.c.b16 %v146, %v145
    %v152 = vpack.c.b16 %v148, %v147
    %vm157 = vcmask 523264
    %v159 = vsel %vm157, %v117, 0
    %161 = vmatprep.subr.bf16.mxu0 0
    %162 = vmatpush1.bf16.msra.mxu0 0
    %163 = vmatprep.subr.bf16.mxu0 0
    %164 = vmatpush1.bf16.msra.mxu0 0
    %165 = vmatprep.subr.bf16.mxu0 0
    %166 = vmatpush1.bf16.msra.mxu0 0
    %167 = vmatprep.subr.bf16.mxu0 0
    %168 = vmatpush1.bf16.msra.mxu0 0
    %169 = vmatprep.subr.bf16.mxu0 0
    %170 = vmatpush1.bf16.msra.mxu0 %v152
    %171 = vmatprep.subr.bf16.mxu0 0
    %172 = vmatpush1.bf16.msra.mxu0 %v151
    %173 = vmatprep.subr.bf16.mxu0 0
    %174 = vmatpush1.bf16.msra.mxu0 %v150
    %175 = vmatprep.subr.bf16.mxu0 0
    %176 = vmatpush1.bf16.msra.mxu0 %v149
    %177 = vmatprep.subr.bf16.mxu0 0
    %178 = vmatpush2.bf16.msra.mxu0 0
    %179 = vmatprep.subr.bf16.mxu0 0
    %180 = vmatpush2.bf16.msra.mxu0 0
    %181 = vmatprep.subr.bf16.mxu0 0
    %182 = vmatpush2.bf16.msra.mxu0 0
    %183 = vmatprep.subr.bf16.mxu0 0
    %184 = vmatpush2.bf16.msra.mxu0 0
    %185 = vmatprep.subr.bf16.mxu0 0
    %186 = vmatpush2.bf16.msra.mxu0 0
    %187 = vmatprep.subr.bf16.mxu0 0
    %188 = vmatpush2.bf16.msra.mxu0 0
    %189 = vmatprep.subr.bf16.mxu0 0
    %190 = vmatpush2.bf16.msra.mxu0 0
    %191 = vmatprep.subr.bf16.mxu0 0
    %192 = vmatpush2.bf16.msra.mxu0 0
    %193 = vmatprep.mubr.bf16.mxu0 0
    %194 = vmatmul.mubr.bf16.gmra.mxu0 %v159
    %v195 = vpop.f32.mrf.mxu0
    %v196 = vadd.f32 %v131, %v195
    %v197 = vpop.f32.mrf.mxu0
    %v198 = vpop.f32.mrf.mxu0
    %v199 = vpop.f32.mrf.mxu0
    %200 = vdwg.mxu0
    %v201 = vmax.f32 %v196, 0.0
    %v202 = vld [vmem:[%s5] sm:$0x1]
    %v203 = vpack.c.bf16 %v201, %v201
    %v204 = vld [vmem:[#allocation2] sm:$0x1]
    %206 = vset.pattern.permute.xlu0 0
    %207 = vperm.xlu0 %206, %v204
    %v208 = vpop.permute.xlu0 %207
    %v210 = vlaneseq
    %v211 = vshrl.u32 %v210, 7
    %v212 = vsub.s32 0, %v211
    %v213 = vrot.slane %v208, %v212
    %v215 = vsel %vm42, %v202, 0
    %v218 = vsel %vm42, %v203, 0
    %220 = vmatprep.subr.bf16.mxu0 0
    %221 = vmatpush1.bf16.xpose.msra.mxu0 0
    %222 = vmatprep.subr.bf16.mxu0 0
    %223 = vmatpush1.bf16.xpose.msra.mxu0 0
    %224 = vmatprep.subr.bf16.mxu0 0
    %225 = vmatpush1.bf16.xpose.msra.mxu0 0
    %226 = vmatprep.subr.bf16.mxu0 0
    %227 = vmatpush1.bf16.xpose.msra.mxu0 0
    %228 = vmatprep.subr.bf16.mxu0 0
    %229 = vmatpush1.bf16.xpose.msra.mxu0 0
    %230 = vmatprep.subr.bf16.mxu0 0
    %231 = vmatpush1.bf16.xpose.msra.mxu0 0
    %232 = vmatprep.subr.bf16.mxu0 0
    %233 = vmatpush1.bf16.xpose.msra.mxu0 0
    %234 = vmatprep.subr.bf16.mxu0 0
    %235 = vmatpush1.bf16.xpose.msra.mxu0 %v218
    %236 = vmatprep.subr.bf16.mxu0 0
    %237 = vmatpush2.bf16.xpose.msra.mxu0 0
    %238 = vmatprep.subr.bf16.mxu0 0
    %239 = vmatpush2.bf16.xpose.msra.mxu0 0
    %240 = vmatprep.subr.bf16.mxu0 0
    %241 = vmatpush2.bf16.xpose.msra.mxu0 0
    %242 = vmatprep.subr.bf16.mxu0 0
    %243 = vmatpush2.bf16.xpose.msra.mxu0 0
    %244 = vmatprep.subr.bf16.mxu0 0
    %245 = vmatpush2.bf16.xpose.msra.mxu0 0
    %246 = vmatprep.subr.bf16.mxu0 0
    %247 = vmatpush2.bf16.xpose.msra.mxu0 0
    %248 = vmatprep.subr.bf16.mxu0 0
    %249 = vmatpush2.bf16.xpose.msra.mxu0 0
    %250 = vmatprep.subr.bf16.mxu0 0
    %251 = vmatpush2.bf16.xpose.msra.mxu0 0
    %252 = vmatprep.mubr.bf16.mxu0 0
    %253 = vmatmul.mubr.bf16.gmra.mxu0 %v215
    %v254 = vpop.f32.mrf.mxu0
    %v255 = vadd.f32 %v213, %v254
    %v256 = vpop.f32.mrf.mxu0
    %v257 = vpop.f32.mrf.mxu0
    %v258 = vpop.f32.mrf.mxu0
    %259 = vdwg.mxu0
    %vm260 = vcmask 57344
    %261 = vst.msk [vmem:[#allocation3] sm:$0x1] %vm260, %v255
    // Predicated region
    $region30: #{tpu_custom_call.1} parent=1 // pred_check
      _
    $region31: #{tpu_custom_call.1} parent=1 // pred_check_branch
      %263 = sbr.rel (0) target = $region33
    $region32: #{tpu_custom_call.1} parent=1 // pred_region
      %s265 = ssub.s32 16, 16
      %266 = vsyncadd [#allocation4], %s265
      %s268 = sshll.u32 [#allocation3], 4
      %s269 = int_to_ptr.vmem [resolvable:$true] %s268
      %271 = dma.vmem_to_hbm [thread:$0]  %s269, 16, %s7, [#allocation4]
    $region33: #{tpu_custom_call.1} parent=1 // pred_fallthru
      _
    // Predicated region
    $region34: #{tpu_custom_call.1} parent=1 // pred_check
      _
    $region35: #{tpu_custom_call.1} parent=1 // pred_check_branch
      %273 = sbr.rel (0) target = $region37
    $region36: #{tpu_custom_call.1} parent=1 // pred_region
      %274 = dma.done [#allocation4], 16
    $region37: #{tpu_custom_call.1} parent=1 // pred_fallthru
      _
    %275 = vsyncpa [#allocation4], 1

</llo_original>
